<compile_context>
chip_gen: v7x
topology: tpu7x:2x2x1
jax: 0.10.0
libtpu: 0.0.40
codegen_flags: <defaults>
</compile_context>

<pallas_src>
import functools
import math

import jax
import jax.numpy as jnp
from jax.experimental import pallas as pl
from jax.experimental.pallas import tpu as pltpu


_TARGET_TILE_BYTES = 4 * 1024 * 1024   # ~4 MiB per main (x / out) buffer
_VMEM_LIMIT_BYTES = 32 * 1024 * 1024   # safe on v5e / v6e / v7x


def build_pe_table(d_model: int, max_len: int = 5000,
                   dtype=jnp.float32) -> jnp.ndarray:
    """Sinusoidal table, shape (max_len, d_model).

    Build ONCE at module init, in the model dtype (avoids per-call astype/slice
    copies).  Odd d_model is handled (the torch reference would error there).
    """
    position = jnp.arange(max_len, dtype=jnp.float32)[:, None]               # (L, 1)
    div_term = jnp.exp(
        jnp.arange(0, d_model, 2, dtype=jnp.float32) * (-math.log(10000.0) / d_model)
    )                                                                        # (ceil(d/2),)
    angles = position * div_term                                             # (L, ceil(d/2))
    pe = jnp.zeros((max_len, d_model), dtype=jnp.float32)
    pe = pe.at[:, 0::2].set(jnp.sin(angles))
    pe = pe.at[:, 1::2].set(jnp.cos(angles)[:, : d_model // 2])              # odd-d safe
    return pe.astype(dtype)


def _add_pe_kernel(x_ref, pe_ref, o_ref, *, batch: int):
    # x_ref / o_ref: (ts, B*D); pe_ref: (ts, D).
    pe = pe_ref[...]
    if batch > 1:
        # Replicate the PE row across the batch along lanes.  This is cheap
        # XLU/VPU work, fully hidden under the HBM-bound DMA stream, and
        # avoids materializing a (S, B*D) PE array in HBM.
        pe = jnp.tile(pe, (1, batch))
    o_ref[...] = (x_ref[...] + pe).astype(o_ref.dtype)


def _choose_seq_tile(seq_len: int, bytes_per_row: int) -> int:
    """Rows per grid step, ~_TARGET_TILE_BYTES for the main streams."""
    if seq_len < 8:
        return seq_len                       # single tiny (partial) block
    ts = _TARGET_TILE_BYTES // max(1, bytes_per_row)
    ts = max(8, (ts // 8) * 8)               # sublane-aligned block rows
    seq8 = (seq_len // 8) * 8                # largest multiple of 8 <= seq_len
    if ts >= seq_len and seq_len >= 16:
        # Whole sequence would fit in one tile: split ~evenly into 2 grid
        # steps so both v7x TensorCores stream (no effect on v5e/v6e).
        ts = ((pl.cdiv(seq_len, 2) + 7) // 8) * 8
    return min(ts, seq8)


def positional_encoding_forward(x: jnp.ndarray, pe: jnp.ndarray,
                                *, donate_x: bool = False) -> jnp.ndarray:
    """x: (S, B, D); pe: full (max_len, D) table. Returns x + pe[:S] broadcast over B."""
    S, B, D = x.shape
    max_len, d_pe = pe.shape
    assert d_pe == D, f"pe d_model {d_pe} != x d_model {D}"
    assert S <= max_len, f"seq_len {S} exceeds PE table max_len {max_len}"
    if pe.dtype != x.dtype:
        # Prefer building the table in the model dtype at init; this is a
        # fallback (one small (max_len, D) copy).
        pe = pe.astype(x.dtype)

    itemsize = jnp.dtype(x.dtype).itemsize
    ts = _choose_seq_tile(S, B * D * itemsize)

    # Free, contiguous-merge reshape to a lane-dense 2-D layout.
    x2 = x.reshape(S, B * D)
    # Pass the FULL pe table: the grid / index_map bounds which rows are DMA'd.
    # Only for tiny S (< 8, ts == S) slice so the pe block equals its full dim.
    pe_in = pe if S >= 8 else pe[:S]

    grid = (pl.cdiv(S, ts),)
    out2 = pl.pallas_call(
        functools.partial(_add_pe_kernel, batch=B),
        out_shape=jax.ShapeDtypeStruct((S, B * D), x.dtype),
        grid_spec=pltpu.PrefetchScalarGridSpec(
            num_scalar_prefetch=0,
            grid=grid,
            in_specs=[
                pl.BlockSpec((ts, B * D), lambda s: (s, 0)),   # x tile
                pl.BlockSpec((ts, D), lambda s: (s, 0)),       # pe rows (1/B of x traffic)
            ],
            out_specs=pl.BlockSpec((ts, B * D), lambda s: (s, 0)),
        ),
        compiler_params=pltpu.CompilerParams(
            dimension_semantics=("parallel",),
            vmem_limit_bytes=_VMEM_LIMIT_BYTES,
        ),
        input_output_aliases={0: 0} if donate_x else {},
    )(x2, pe_in)
    return out2.reshape(S, B, D)


if __name__ == "__main__":
    # Small shapes consistent with the module (d_model=32, seq=8, batch=2).
    d_model, seq_len, batch, max_len = 32, 8, 2, 64

    key = jax.random.PRNGKey(0)
    x = jax.random.normal(key, (seq_len, batch, d_model), dtype=jnp.float32)
    pe = build_pe_table(d_model, max_len, dtype=x.dtype)

    out = jax.block_until_ready(positional_encoding_forward(x, pe))
    ref = x + pe[:seq_len][:, None, :]
    assert out.shape == (seq_len, batch, d_model)
    assert jnp.allclose(out, ref, atol=1e-6), "mismatch vs reference (small-D case)"

    # Second small case: 128-aligned d_model, multi-step grid with a partial tail block.
    d2, s2, b2 = 128, 24, 4
    x_b = jax.random.normal(jax.random.PRNGKey(1), (s2, b2, d2), dtype=jnp.float32)
    pe_b = build_pe_table(d2, max_len, dtype=x_b.dtype)
    out_b = jax.block_until_ready(positional_encoding_forward(x_b, pe_b))
    ref_b = x_b + pe_b[:s2][:, None, :]
    assert jnp.allclose(out_b, ref_b, atol=1e-6), "mismatch vs reference (aligned-D case)"

    print("KERNEL_OK")
</pallas_src>

<mosaic_0001>
module attributes {stable_mosaic.version = 11 : i64} {
  func.func @_add_pe_kernel(%arg0: i32, %arg1: memref<8x64xf32, #tpu.memory_space<vmem>>, %arg2: memref<8x32xf32, #tpu.memory_space<vmem>>, %arg3: memref<8x64xf32, #tpu.memory_space<vmem>>) attributes {dimension_semantics = [#tpu.dimension_semantics<parallel>], iteration_bounds = array<i64: 1>, scalar_prefetch = 0 : i64, scratch_operands = 0 : i64, tpu.core_type = #tpu.core_type<tc>, window_params = [{transform_indices = @transform_0, window_bounds = array<i64: 8, 64>}, {transform_indices = @transform_1, window_bounds = array<i64: 8, 32>}, {transform_indices = @transform_2, window_bounds = array<i64: 8, 64>}]} {
    %c0 = arith.constant 0 : index
    %c0_0 = arith.constant 0 : index
    %0 = vector.load %arg2[%c0, %c0_0] : memref<8x32xf32, #tpu.memory_space<vmem>>, vector<8x32xf32>
    %1 = tpu.concatenate %0, %0 in 1 : vector<8x32xf32>, vector<8x32xf32> -> vector<8x64xf32>
    %c0_1 = arith.constant 0 : index
    %c0_2 = arith.constant 0 : index
    %2 = vector.load %arg1[%c0_1, %c0_2] : memref<8x64xf32, #tpu.memory_space<vmem>>, vector<8x64xf32>
    %3 = arith.addf %2, %1 : vector<8x64xf32>
    %c0_3 = arith.constant 0 : index
    %c0_4 = arith.constant 0 : index
    %4 = vector.load %arg3[%c0_3, %c0_4] : memref<8x64xf32, #tpu.memory_space<vmem>>, vector<8x64xf32>
    tpu.vector_store %arg3[%c0_3, %c0_4], %3 {strides = array<i32>} : memref<8x64xf32, #tpu.memory_space<vmem>>, vector<8x64xf32>,
    return
  }
  func.func @transform_0(%arg0: i32) -> (i32, i32) {
    %c0_i32 = arith.constant 0 : i32
    %c0_i32_0 = arith.constant 0 : i32
    return %arg0, %c0_i32 : i32, i32
  }
  func.func @transform_1(%arg0: i32) -> (i32, i32) {
    %c0_i32 = arith.constant 0 : i32
    %c0_i32_0 = arith.constant 0 : i32
    return %arg0, %c0_i32 : i32, i32
  }
  func.func @transform_2(%arg0: i32) -> (i32, i32) {
    %c0_i32 = arith.constant 0 : i32
    %c0_i32_0 = arith.constant 0 : i32
    return %arg0, %c0_i32 : i32, i32
  }
}

</mosaic_0001>

<llo_original>
// kernel: tpu_custom_call.1
$region0: #{tpu_custom_call.1}
  #allocation0 [shape = 'u32[]', space=smem, size = 0x4, offset = 0x4, fixed_abs, tag = 'smem constant byte address 0x4 - core index']
  #allocation1 [shape = 'u32[144,128]{1,0:T(1,128)}', space=vmem, size = 0x12000, scoped, tag = 'internal scratch']
  %s0 = inlined_call_operand.vmem [shape: f32[8,64], index: 0, kind: input, shape index: {}]
  %s1 = inlined_call_operand.vmem [shape: f32[64,32], index: 1, kind: input, shape index: {}]
  %s2 = inlined_call_operand.hbm [shape: f32[8,64], index: 2, kind: output, shape index: {}]
  %s3 = sld [smem:[#allocation0]]
  $region18: #{tpu_custom_call.1} parent=0
    _
  %s5 = ssub.s32 1, %s3
  %s6 = scalar_select 0, %s5, %s3
  $region1: #{tpu_custom_call.1} parent=0
    #allocation2 [shape = 'u8[4096]{0}', space=vmem, size = 0x1000, scoped, tag = 'output window, operand 0, single buffered']
    #allocation3 [shape = 's32[1]{0}', space=sflag, size = 0x4, scoped, tag = 'scoped memory for tpu_custom_call.1']
    %7 = vsyncpa [#allocation3], 0
    // Predicated region
    $region2: #{tpu_custom_call.1} parent=1 // pred_check
      _
    $region3: #{tpu_custom_call.1} parent=1 // pred_check_branch
      %9 = sbr.rel (0) target = $region5
    $region4: #{tpu_custom_call.1} parent=1 // pred_region
      _
    $region5: #{tpu_custom_call.1} parent=1 // pred_fallthru
      _
    // Predicated region
    $region6: #{tpu_custom_call.1} parent=1 // pred_check
      _
    $region7: #{tpu_custom_call.1} parent=1 // pred_check_branch
      %11 = sbr.rel (0) target = $region9
    $region8: #{tpu_custom_call.1} parent=1 // pred_region
      _
    $region9: #{tpu_custom_call.1} parent=1 // pred_fallthru
      _
    %v12 = vld [vmem:[%s1] sm:$0xff]
    %14 = vrot.lane.b32.xlu0 %v12, 32
    %v15 = vpop.permute.xlu0 %14
    %vm17 = vcmask 261120
    %v18 = vsel %vm17, %v12, %v15
    %v19 = vld [vmem:[%s0] sm:$0xff]
    %v20 = vadd.f32 %v19, %v18
    %vm21 = vcmask 523264
    %22 = vst.msk [vmem:[#allocation2] sm:$0xff] %vm21, %v20
    // Predicated region
    $region10: #{tpu_custom_call.1} parent=1 // pred_check
      _
    $region11: #{tpu_custom_call.1} parent=1 // pred_check_branch
      %24 = sbr.rel (0) target = $region13
    $region12: #{tpu_custom_call.1} parent=1 // pred_region
      %s26 = ssub.s32 128, 128
      %27 = vsyncadd [#allocation3], %s26
      %s29 = sshll.u32 [#allocation2], 4
      %s30 = int_to_ptr.vmem [resolvable:$true] %s29
      %32 = dma.vmem_to_hbm [thread:$0]  %s30, 128, %s2, [#allocation3]
    $region13: #{tpu_custom_call.1} parent=1 // pred_fallthru
      _
    // Predicated region
    $region14: #{tpu_custom_call.1} parent=1 // pred_check
      _
    $region15: #{tpu_custom_call.1} parent=1 // pred_check_branch
      %34 = sbr.rel (0) target = $region17
    $region16: #{tpu_custom_call.1} parent=1 // pred_region
      %35 = dma.done [#allocation3], 128
    $region17: #{tpu_custom_call.1} parent=1 // pred_fallthru
      _
    %36 = vsyncpa [#allocation3], 1

</llo_original>
